<compile_context>
chip_gen: v7x
topology: tpu7x:2x2x1
jax: 0.10.0
libtpu: 0.0.40
codegen_flags: <defaults>
</compile_context>

<pallas_src>
import math

import jax
import jax.numpy as jnp
from jax.experimental import pallas as pl
from jax.experimental.pallas import tpu as pltpu


# ----------------------------------------------------------------------------
# Kernel
# ----------------------------------------------------------------------------
def _gelu_exact(x):
    # Matches torch.nn.functional.gelu default (erf-based, exact). f32 math.
    return 0.5 * x * (1.0 + jax.lax.erf(x * (1.0 / math.sqrt(2.0))))


def _gelu_tanh(x):
    # Optional tanh approximation (EUP slot, nearly free) -- NOT torch default.
    c = math.sqrt(2.0 / math.pi)
    return 0.5 * x * (1.0 + jnp.tanh(c * (x + 0.044715 * x * x * x)))


def _make_mlp_kernel(use_tanh_gelu):
    gelu = _gelu_tanh if use_tanh_gelu else _gelu_exact

    def mlp_kernel(x_ref, wfc_ref, wproj_ref, o_ref, acc_ref):
        # x_ref:     (tm, D)   token-row tile (resident across the H axis)
        # wfc_ref:   (D, th)   H-chunk of fc weight (transposed, streamed)
        # wproj_ref: (th, D)   H-chunk of proj weight (transposed, streamed)
        # o_ref:     (tm, D)   output tile (written on the last H step)
        # acc_ref:   (tm, D)   f32 accumulator scratch
        h_step = pl.program_id(1)

        @pl.when(h_step == 0)
        def _():
            acc_ref[...] = jnp.zeros_like(acc_ref)

        # First matmul: full contraction over D for this H-chunk (f32 accumulate).
        h = jnp.dot(x_ref[...], wfc_ref[...], preferred_element_type=jnp.float32)
        g = gelu(h)  # f32 elementwise
        # Second matmul: partial contraction over this H-chunk, accumulated in f32.
        acc_ref[...] += jnp.dot(g.astype(wproj_ref.dtype), wproj_ref[...],
                                preferred_element_type=jnp.float32)

        @pl.when(h_step == pl.num_programs(1) - 1)
        def _():
            o_ref[...] = acc_ref[...].astype(o_ref.dtype)

    return mlp_kernel


# ----------------------------------------------------------------------------
# Generation-aware tile selection
# ----------------------------------------------------------------------------
def _device_info():
    """Returns (vmem_capacity_bytes, device_kind_lowercase)."""
    vmem_bytes = 128 << 20
    kind = ""
    try:
        info = pltpu.get_tpu_info()
        vmem_bytes = int(getattr(info, "vmem_capacity_bytes", vmem_bytes))
    except Exception:
        pass
    try:
        kind = jax.devices()[0].device_kind.lower()
    except Exception:
        pass
    return vmem_bytes, kind


def _gen_params():
    """Per-generation (tile budget, row-tile ceiling, vmem-limit cap)."""
    vmem_bytes, kind = _device_info()
    if vmem_bytes <= (64 << 20):
        # v7x: 64 MiB VMEM, ridge ~310 FLOP/B -> tm=512 already compute-bound.
        budget = 44 << 20
        tm_max = 512
        vmem_cap = max(vmem_bytes - (8 << 20), 32 << 20)
    elif "v5" in kind:
        # v5e: ridge ~240 FLOP/B -> tm in 256-512 is enough; spare VMEM goes to
        # deeper weight buffering rather than bigger tiles.
        budget = 64 << 20
        tm_max = 512
        vmem_cap = 100 << 20
    else:
        # v6e (or unknown 128-MiB part): ridge ~650 FLOP/B -> allow tm=1024.
        budget = 96 << 20
        tm_max = 1024
        vmem_cap = 100 << 20
    return budget, tm_max, vmem_cap, vmem_bytes


_ROW_CANDS = (1024, 512, 256, 128, 64, 32, 16, 8)
_HID_CANDS = (1024, 512, 256, 128)


def _pick_row_tile(M, tm_max):
    cands = [c for c in _ROW_CANDS if c <= tm_max]
    # 1) prefer >=2 parallel steps with an EVEN count (v7x megacore splits
    #    cleanly across its 2 TensorCores; free on single-TC parts).
    for c in cands:
        if M % c == 0 and M // c >= 2 and (M // c) % 2 == 0:
            return c
    # 2) any >=2 parallel steps.
    for c in cands:
        if M % c == 0 and M // c >= 2:
            return c
    # 3) any legal divisor.
    for c in cands:
        if M % c == 0:
            return c
    return M


def _pick_hidden_tile(H):
    for c in _HID_CANDS:
        if H % c == 0:
            return c
    return H


def _footprint_bytes(tm, th, D, in_itemsize, out_itemsize, weight_buffers=2):
    # Double-buffered x/out tiles, N-buffered weight chunks, f32 accumulator.
    return (2 * tm * D * in_itemsize                    # x tile
            + weight_buffers * D * th * in_itemsize     # wfc chunk
            + weight_buffers * th * D * in_itemsize     # wproj chunk
            + 2 * tm * D * out_itemsize                 # out tile
            + tm * D * 4)                               # f32 accumulator


def _fit_tiles(M, H, D, tm, th, in_itemsize, out_itemsize, budget,
               weight_buffers=2):
    def fits(tm_, th_):
        return _footprint_bytes(tm_, th_, D, in_itemsize, out_itemsize,
                                weight_buffers) <= budget

    # 1) shrink hidden chunk, but keep th >= 256 (MXU occupancy on 2x256 parts).
    while not fits(tm, th) and th > 256 and th % 2 == 0 and H % (th // 2) == 0:
        th //= 2
    # 2) shrink row tile.
    while not fits(tm, th) and tm > 64 and tm % 2 == 0 and M % (tm // 2) == 0:
        tm //= 2
    # 3) last resort: shrink th below 256.
    while not fits(tm, th) and th > 128 and th % 2 == 0 and H % (th // 2) == 0:
        th //= 2
    # 4) final fallback: smallest legal candidates.
    if not fits(tm, th):
        for c_tm in reversed(_ROW_CANDS):
            if M % c_tm == 0:
                tm = c_tm
                break
        for c_th in reversed(_HID_CANDS):
            if H % c_th == 0:
                th = c_th
                break
    return tm, th


# ----------------------------------------------------------------------------
# Wrapper
# ----------------------------------------------------------------------------
def mlp_pallas(x, w_fc_t, w_proj_t, *, tm=None, th=None,
               compute_dtype=jnp.bfloat16, out_dtype=None,
               weight_buffers=2, gelu_approximate=False):
    """x: [B, T, D]; w_fc_t: [D, H]; w_proj_t: [H, D]  ->  [B, T, D].

    Weights are stored transposed (in_features, out_features) so the kernel
    computes plain x @ W.  Pass bf16 weights/activations to avoid any per-call
    cast (pre-cast once at init); accumulation and GELU stay in f32.
    """
    B, T, D = x.shape
    Din, H = w_fc_t.shape
    assert Din == D and w_proj_t.shape == (H, D)
    M = B * T

    out_dtype = x.dtype if out_dtype is None else out_dtype
    in_itemsize = jnp.dtype(compute_dtype).itemsize
    out_itemsize = jnp.dtype(out_dtype).itemsize

    budget, tm_max, vmem_cap, vmem_phys = _gen_params()

    if tm is None:
        tm = _pick_row_tile(M, tm_max)
    if th is None:
        th = _pick_hidden_tile(H)
    tm, th = _fit_tiles(M, H, D, tm, th, in_itemsize, out_itemsize, budget,
                        weight_buffers)
    assert M % tm == 0 and H % th == 0, "token/hidden dims must tile evenly"

    footprint = _footprint_bytes(tm, th, D, in_itemsize, out_itemsize,
                                 weight_buffers)
    if footprint > vmem_phys - (8 << 20):
        raise ValueError(
            f"MLP tile footprint {footprint} B exceeds physical VMEM "
            f"({vmem_phys} B); no legal tiling found for M={M}, H={H}, D={D}.")
    vmem_limit = int(min(max(int(footprint * 1.5) + (4 << 20), 32 << 20),
                         vmem_cap))
    # TODO(synk): for real model sizes D should be a multiple of 128 (lane-dense
    # stores); the toy D=32 only works because the block equals the full array.

    # Hot path: cast only if the caller did not already provide compute_dtype.
    xc = x.reshape(M, D)
    if xc.dtype != compute_dtype:
        xc = xc.astype(compute_dtype)
    wfc = w_fc_t if w_fc_t.dtype == compute_dtype else w_fc_t.astype(compute_dtype)
    wproj = (w_proj_t if w_proj_t.dtype == compute_dtype
             else w_proj_t.astype(compute_dtype))

    # Honest memory cost: weights are re-streamed once per row-tile pass.
    n_row_tiles = M // tm
    cost = pl.CostEstimate(
        flops=4 * M * D * H,                      # two matmuls
        transcendentals=M * H,                    # one erf/tanh per hidden act
        bytes_accessed=(M * D * in_itemsize
                        + n_row_tiles * (D * H + H * D) * in_itemsize
                        + M * D * out_itemsize))

    # Optional deeper weight buffering (only when explicitly requested).
    if weight_buffers > 2:
        wfc_spec = pl.BlockSpec((D, th), lambda i, h: (0, h),
                                pipeline_mode=pl.Buffered(weight_buffers))
        wproj_spec = pl.BlockSpec((th, D), lambda i, h: (h, 0),
                                  pipeline_mode=pl.Buffered(weight_buffers))
    else:
        wfc_spec = pl.BlockSpec((D, th), lambda i, h: (0, h))
        wproj_spec = pl.BlockSpec((th, D), lambda i, h: (h, 0))

    out2 = pl.pallas_call(
        _make_mlp_kernel(gelu_approximate),
        out_shape=jax.ShapeDtypeStruct((M, D), out_dtype),
        grid_spec=pltpu.PrefetchScalarGridSpec(
            num_scalar_prefetch=0,
            grid=(M // tm, H // th),
            in_specs=[
                pl.BlockSpec((tm, D), lambda i, h: (i, 0)),   # x tile (resident over h)
                wfc_spec,                                     # fc weight chunk
                wproj_spec,                                    # proj weight chunk
            ],
            out_specs=pl.BlockSpec((tm, D), lambda i, h: (i, 0)),
            scratch_shapes=[pltpu.VMEM((tm, D), jnp.float32)],
        ),
        compiler_params=pltpu.CompilerParams(
            dimension_semantics=("parallel", "arbitrary"),
            vmem_limit_bytes=vmem_limit),
        cost_estimate=cost,
    )(xc, wfc, wproj)
    return out2.reshape(B, T, D)


def mlp_reference(x, w_fc_t, w_proj_t, compute_dtype=jnp.bfloat16,
                  out_dtype=None):
    # Plain-JAX reference with the same precision policy as the kernel.
    out_dtype = x.dtype if out_dtype is None else out_dtype
    xc = x.astype(compute_dtype)
    h = jnp.dot(xc, w_fc_t.astype(compute_dtype),
                preferred_element_type=jnp.float32)
    g = _gelu_exact(h)
    y = jnp.dot(g.astype(compute_dtype), w_proj_t.astype(compute_dtype),
                preferred_element_type=jnp.float32)
    return y.astype(out_dtype)


def init_params(key, n_embd, dtype=jnp.bfloat16):
    # Deterministic init mimicking nn.Linear default: U(-1/sqrt(fan_in), ...).
    # Pre-cast ONCE to the compute dtype so the hot path never re-casts weights.
    k1, k2 = jax.random.split(key)
    hidden = 4 * n_embd
    bound_fc = 1.0 / math.sqrt(n_embd)
    bound_proj = 1.0 / math.sqrt(hidden)
    # Stored already transposed: (in, out).  Module has bias=False, so no bias.
    w_fc_t = jax.random.uniform(k1, (n_embd, hidden), jnp.float32,
                                minval=-bound_fc, maxval=bound_fc).astype(dtype)
    w_proj_t = jax.random.uniform(k2, (hidden, n_embd), jnp.float32,
                                  minval=-bound_proj,
                                  maxval=bound_proj).astype(dtype)
    return w_fc_t, w_proj_t


if __name__ == "__main__":
    B, T, n_embd = 2, 8, 32  # small shapes; hidden = 4 * n_embd = 128
    key = jax.random.PRNGKey(0)
    kx, kp = jax.random.split(key)

    # bf16 activations + pre-cast bf16 weights: no cast inside the hot path.
    x = jax.random.normal(kx, (B, T, n_embd), dtype=jnp.float32).astype(
        jnp.bfloat16)
    w_fc_t, w_proj_t = init_params(kp, n_embd, dtype=jnp.bfloat16)

    out = mlp_pallas(x, w_fc_t, w_proj_t)
    out = jax.block_until_ready(out)

    ref = mlp_reference(x, w_fc_t, w_proj_t)
    assert out.shape == (B, T, n_embd)
    assert out.dtype == x.dtype
    err = float(jnp.max(jnp.abs(out.astype(jnp.float32)
                                - ref.astype(jnp.float32))))
    assert err < 2e-2, err

    print("KERNEL_OK")
</pallas_src>

<mosaic_0001>
module attributes {stable_mosaic.version = 11 : i64} {
  func.func @mlp_kernel(%arg0: i32, %arg1: i32, %arg2: memref<8x32xbf16, #tpu.memory_space<vmem>>, %arg3: memref<32x128xbf16, #tpu.memory_space<vmem>>, %arg4: memref<128x32xbf16, #tpu.memory_space<vmem>>, %arg5: memref<8x32xbf16, #tpu.memory_space<vmem>>, %arg6: memref<8x32xf32, #tpu.memory_space<vmem>>) attributes {dimension_semantics = [#tpu.dimension_semantics<parallel>, #tpu.dimension_semantics<arbitrary>], iteration_bounds = array<i64: 2, 1>, scalar_prefetch = 0 : i64, scratch_operands = 1 : i64, tpu.core_type = #tpu.core_type<tc>, window_params = [{transform_indices = @transform_0, window_bounds = array<i64: 8, 32>}, {transform_indices = @transform_1, window_bounds = array<i64: 32, 128>}, {transform_indices = @transform_2, window_bounds = array<i64: 128, 32>}, {transform_indices = @transform_3, window_bounds = array<i64: 8, 32>}]} {
    %c0_i32 = arith.constant 0 : i32
    %0 = arith.cmpi eq, %arg1, %c0_i32 : i32
    %1 = arith.extui %0 : i1 to i32
    %c0_i32_0 = arith.constant 0 : i32
    %2 = arith.cmpi ne, %1, %c0_i32_0 : i32
    scf.if %2 {
      %cst_16 = arith.constant 0.000000e+00 : f32
      %23 = vector.broadcast %cst_16 : f32 to vector<8x32xf32>
      %c0_17 = arith.constant 0 : index
      %c0_18 = arith.constant 0 : index
      %24 = vector.load %arg6[%c0_17, %c0_18] : memref<8x32xf32, #tpu.memory_space<vmem>>, vector<8x32xf32>
      tpu.vector_store %arg6[%c0_17, %c0_18], %23 {strides = array<i32>} : memref<8x32xf32, #tpu.memory_space<vmem>>, vector<8x32xf32>,
    } else {
    }
    %c0 = arith.constant 0 : index
    %c0_1 = arith.constant 0 : index
    %3 = vector.load %arg2[%c0, %c0_1] : memref<8x32xbf16, #tpu.memory_space<vmem>>, vector<8x32xbf16>
    %c0_2 = arith.constant 0 : index
    %c0_3 = arith.constant 0 : index
    %4 = vector.load %arg3[%c0_2, %c0_3] : memref<32x128xbf16, #tpu.memory_space<vmem>>, vector<32x128xbf16>
    %cst = arith.constant dense<0.000000e+00> : vector<8x128xf32>
    %5 = tpu.matmul %3, %4, %cst {dimension_numbers = #tpu.dot_dimension_numbers<[1], [0], [0], [1], [0, 0, 1, 1], [], []>} : vector<8x32xbf16>, vector<32x128xbf16>, vector<8x128xf32> -> vector<8x128xf32>
    %cst_4 = arith.constant 5.000000e-01 : f32
    %6 = vector.broadcast %cst_4 : f32 to vector<8x128xf32>
    %7 = arith.mulf %6, %5 : vector<8x128xf32>
    %cst_5 = arith.constant 0.707106769 : f32
    %8 = vector.broadcast %cst_5 : f32 to vector<8x128xf32>
    %9 = arith.mulf %5, %8 : vector<8x128xf32>
    %10 = math.erf %9 : vector<8x128xf32>
    %cst_6 = arith.constant 1.000000e+00 : f32
    %11 = vector.broadcast %cst_6 : f32 to vector<8x128xf32>
    %12 = arith.addf %11, %10 : vector<8x128xf32>
    %13 = arith.mulf %7, %12 : vector<8x128xf32>
    %c0_7 = arith.constant 0 : index
    %c0_8 = arith.constant 0 : index
    %14 = vector.load %arg6[%c0_7, %c0_8] : memref<8x32xf32, #tpu.memory_space<vmem>>, vector<8x32xf32>
    %15 = arith.truncf %13 : vector<8x128xf32> to vector<8x128xbf16>
    %c0_9 = arith.constant 0 : index
    %c0_10 = arith.constant 0 : index
    %16 = vector.load %arg4[%c0_9, %c0_10] : memref<128x32xbf16, #tpu.memory_space<vmem>>, vector<128x32xbf16>
    %cst_11 = arith.constant dense<0.000000e+00> : vector<8x32xf32>
    %17 = tpu.matmul %15, %16, %cst_11 {dimension_numbers = #tpu.dot_dimension_numbers<[1], [0], [0], [1], [0, 0, 1, 1], [], []>} : vector<8x128xbf16>, vector<128x32xbf16>, vector<8x32xf32> -> vector<8x32xf32>
    %18 = arith.addf %14, %17 : vector<8x32xf32>
    %c0_12 = arith.constant 0 : index
    %c0_13 = arith.constant 0 : index
    %19 = vector.load %arg6[%c0_12, %c0_13] : memref<8x32xf32, #tpu.memory_space<vmem>>, vector<8x32xf32>
    tpu.vector_store %arg6[%c0_12, %c0_13], %18 {strides = array<i32>} : memref<8x32xf32, #tpu.memory_space<vmem>>, vector<8x32xf32>,
    %c0_i32_14 = arith.constant 0 : i32
    %20 = arith.cmpi eq, %arg1, %c0_i32_14 : i32
    %21 = arith.extui %20 : i1 to i32
    %c0_i32_15 = arith.constant 0 : i32
    %22 = arith.cmpi ne, %21, %c0_i32_15 : i32
    scf.if %22 {
      %c0_16 = arith.constant 0 : index
      %c0_17 = arith.constant 0 : index
      %23 = vector.load %arg6[%c0_16, %c0_17] : memref<8x32xf32, #tpu.memory_space<vmem>>, vector<8x32xf32>
      %24 = arith.truncf %23 : vector<8x32xf32> to vector<8x32xbf16>
      %c0_18 = arith.constant 0 : index
      %c0_19 = arith.constant 0 : index
      %25 = vector.load %arg5[%c0_18, %c0_19] : memref<8x32xbf16, #tpu.memory_space<vmem>>, vector<8x32xbf16>
      tpu.vector_store %arg5[%c0_18, %c0_19], %24 {strides = array<i32>} : memref<8x32xbf16, #tpu.memory_space<vmem>>, vector<8x32xbf16>,
    } else {
    }
    return
  }
  func.func @transform_0(%arg0: i32, %arg1: i32) -> (i32, i32) {
    %c0_i32 = arith.constant 0 : i32
    %c0_i32_0 = arith.constant 0 : i32
    return %arg0, %c0_i32 : i32, i32
  }
  func.func @transform_1(%arg0: i32, %arg1: i32) -> (i32, i32) {
    %c0_i32 = arith.constant 0 : i32
    %c0_i32_0 = arith.constant 0 : i32
    return %c0_i32, %arg1 : i32, i32
  }
  func.func @transform_2(%arg0: i32, %arg1: i32) -> (i32, i32) {
    %c0_i32 = arith.constant 0 : i32
    %c0_i32_0 = arith.constant 0 : i32
    return %arg1, %c0_i32 : i32, i32
  }
  func.func @transform_3(%arg0: i32, %arg1: i32) -> (i32, i32) {
    %c0_i32 = arith.constant 0 : i32
    %c0_i32_0 = arith.constant 0 : i32
    return %arg0, %c0_i32 : i32, i32
  }
}

</mosaic_0001>

<llo_original>
// kernel: tpu_custom_call.1
$region0: #{tpu_custom_call.1}
  #allocation0 [shape = 'u32[]', space=smem, size = 0x4, offset = 0x4, fixed_abs, tag = 'smem constant byte address 0x4 - core index']
  #allocation1 [shape = 'u32[144,128]{1,0:T(1,128)}', space=vmem, size = 0x12000, scoped, tag = 'internal scratch']
  #allocation2 [shape = 'f32[8,32]{1,0:T(8,128)}', space=vmem, size = 0x1000, scoped, tag = 'scratch operand']
  %s0 = inlined_call_operand.vmem [shape: bf16[16,32], index: 0, kind: input, shape index: {}]
  %s1 = inlined_call_operand.vmem [shape: bf16[32,128], index: 1, kind: input, shape index: {}]
  %s2 = inlined_call_operand.vmem [shape: bf16[128,32], index: 2, kind: input, shape index: {}]
  %s3 = inlined_call_operand.hbm [shape: bf16[16,32], index: 3, kind: output, shape index: {}]
  %s4 = sld [smem:[#allocation0]]
  $region53: #{tpu_custom_call.1} parent=0
    _
  %s6 = ssub.s32 1, %s4
  %s7 = scalar_select 0, %s6, %s4
  $region1: #{tpu_custom_call.1} parent=0
    #allocation3 [shape = 'u8[4096]{0}', space=vmem, size = 0x1000, scoped, tag = 'output window, operand 0']
    #allocation4 [shape = 's32[2]{0}', space=sflag, size = 0x8, scoped, tag = 'scoped memory for tpu_custom_call.1']
    %8 = vsyncpa [#allocation4], 0
    %s9 = scalar_lea.sflag [#allocation4], 1
    %10 = vsyncpa %s9, 0
    loop: start=0, step=1, limit=4
    $region2: #{tpu_custom_call.1} parent=1 // loop_pre_header
      _
    $region3: #{tpu_custom_call.1} parent=1 // loop_header
      %s12 = sphi 0, %s16
      %p13 = scmp.ge.s32.totalorder %s12, 4
      %s19 = sphi 0, %s31
      %s20 = sphi 0, %s27
      %s21 = sphi 0, %s19
      %s22 = sphi 0, %s20
      %s23 = sphi 0, %s21
      %s24 = sphi 0, %s22
      %s34 = sphi 0, %s36
      %s37 = sphi 0, %s34
      %s38 = sphi 0, %s37
      %s54 = sphi 0, %s38
      %s60 = sphi 0, %s62
      %s63 = sphi 0, %s60
      %s64 = sphi 0, %s63
      %s80 = sphi 0, %s64
      %s86 = sphi 0, %s88
      %s89 = sphi 0, %s86
      %s90 = sphi 0, %s89
      %s106 = sphi 0, %s90
      %s112 = sphi 0, %s114
      %s115 = sphi 0, %s112
      %s116 = sphi 0, %s115
      %s132 = sphi 0, %s116
    $region4: #{tpu_custom_call.1} parent=1 // loop_header_branch
      %15 = sbr.rel (%p13) target = $region8
    $region5: #{tpu_custom_call.1} parent=1 // loop_body
      %s17 = ssub.s32 %s12, 1
      %s18 = ssub.s32 %s12, 2
      %s25 = sadd.s32 1, %s20
      %p26 = scmp.ge.s32.totalorder %s25, 1
      %s27 = scalar_select %p26, 0, %s25
      %s28 = sadd.s32 1, %s19
      %s29 = scalar_select %p26, %s28, %s19
      %p30 = scmp.ge.s32.totalorder %s29, 2
      %s31 = scalar_select %p30, 0, %s29
      %s32 = ssub.s32 %s19, %s31
      %p33 = scmp.eq.s32.totalorder %s32, 0
      %s35 = sadd.s32 %s34, 1
      %s36 = scalar_select %p33, %s34, %s35
      %p39 = pneg %p33
      %p40 = scmp.eq.s32.totalorder %s12, 1
      %p41 = por %p39, %p40
      %p42 = scmp.ne.s32.totalorder %s34, %s37
      %p43 = scmp.eq.s32.totalorder %s12, 0
      %p44 = por %p42, %p43
      %p45 = scmp.ne.s32.totalorder %s34, %s37
      %p46 = scmp.eq.s32.totalorder %s17, 1
      %p47 = por %p45, %p46
      %p48 = scmp.ne.s32.totalorder %s37, %s38
      %p49 = scmp.eq.s32.totalorder %s17, 0
      %p50 = por %p48, %p49
      %p51 = scmp.ne.s32.totalorder %s37, %s38
      %p52 = scmp.eq.s32.totalorder %s18, 1
      %p53 = por %p51, %p52
      %p55 = scmp.ne.s32.totalorder %s38, %s54
      %p56 = scmp.eq.s32.totalorder %s18, 0
      %p57 = por %p55, %p56
      %s58 = ssub.s32 %s20, %s27
      %p59 = scmp.eq.s32.totalorder %s58, 0
      %s61 = sadd.s32 %s60, 1
      %s62 = scalar_select %p59, %s60, %s61
      %p65 = pneg %p59
      %p66 = scmp.eq.s32.totalorder %s12, 1
      %p67 = por %p65, %p66
      %p68 = scmp.ne.s32.totalorder %s60, %s63
      %p69 = scmp.eq.s32.totalorder %s12, 0
      %p70 = por %p68, %p69
      %p71 = scmp.ne.s32.totalorder %s60, %s63
      %p72 = scmp.eq.s32.totalorder %s17, 1
      %p73 = por %p71, %p72
      %p74 = scmp.ne.s32.totalorder %s63, %s64
      %p75 = scmp.eq.s32.totalorder %s17, 0
      %p76 = por %p74, %p75
      %p77 = scmp.ne.s32.totalorder %s63, %s64
      %p78 = scmp.eq.s32.totalorder %s18, 1
      %p79 = por %p77, %p78
      %p81 = scmp.ne.s32.totalorder %s64, %s80
      %p82 = scmp.eq.s32.totalorder %s18, 0
      %p83 = por %p81, %p82
      %s84 = ssub.s32 %s20, %s27
      %p85 = scmp.eq.s32.totalorder %s84, 0
      %s87 = sadd.s32 %s86, 1
      %s88 = scalar_select %p85, %s86, %s87
      %p91 = pneg %p85
      %p92 = scmp.eq.s32.totalorder %s12, 1
      %p93 = por %p91, %p92
      %p94 = scmp.ne.s32.totalorder %s86, %s89
      %p95 = scmp.eq.s32.totalorder %s12, 0
      %p96 = por %p94, %p95
      %p97 = scmp.ne.s32.totalorder %s86, %s89
      %p98 = scmp.eq.s32.totalorder %s17, 1
      %p99 = por %p97, %p98
      %p100 = scmp.ne.s32.totalorder %s89, %s90
      %p101 = scmp.eq.s32.totalorder %s17, 0
      %p102 = por %p100, %p101
      %p103 = scmp.ne.s32.totalorder %s89, %s90
      %p104 = scmp.eq.s32.totalorder %s18, 1
      %p105 = por %p103, %p104
      %p107 = scmp.ne.s32.totalorder %s90, %s106
      %p108 = scmp.eq.s32.totalorder %s18, 0
      %p109 = por %p107, %p108
      %s110 = ssub.s32 %s19, %s31
      %p111 = scmp.eq.s32.totalorder %s110, 0
      %s113 = sadd.s32 %s112, 1
      %s114 = scalar_select %p111, %s112, %s113
      %p117 = pneg %p111
      %p118 = scmp.eq.s32.totalorder %s12, 1
      %p119 = por %p117, %p118
      %p120 = scmp.ne.s32.totalorder %s112, %s115
      %p121 = scmp.eq.s32.totalorder %s12, 0
      %p122 = por %p120, %p121
      %p123 = scmp.ne.s32.totalorder %s112, %s115
      %p124 = scmp.eq.s32.totalorder %s17, 1
      %p125 = por %p123, %p124
      %p126 = scmp.ne.s32.totalorder %s115, %s116
      %p127 = scmp.eq.s32.totalorder %s17, 0
      %p128 = por %p126, %p127
      %p129 = scmp.ne.s32.totalorder %s115, %s116
      %p130 = scmp.eq.s32.totalorder %s18, 1
      %p131 = por %p129, %p130
      %p133 = scmp.ne.s32.totalorder %s116, %s132
      %p134 = scmp.eq.s32.totalorder %s18, 0
      %p135 = por %p133, %p134
      %p136 = scmp.le.s32.totalorder 1, %s12
      %p137 = scmp.lt.s32.totalorder %s12, 3
      %p138 = pnand %p136, %p137
      %p139 = pneg %p138
      // Predicated region
      $region9: #{tpu_custom_call.1} parent=5 // pred_check
        _
      $region10: #{tpu_custom_call.1} parent=5 // pred_check_branch
        %141 = sbr.rel (%p138) target = $region12
      $region11: #{tpu_custom_call.1} parent=5 // pred_region
        %s142 = ssub.s32 %s12, 1
        // Predicated region
        $region13: #{tpu_custom_call.1} parent=11 // pred_check
          %p143 = pneg %p76
        $region14: #{tpu_custom_call.1} parent=11 // pred_check_branch
          %145 = sbr.rel (%p143) target = $region16
        $region15: #{tpu_custom_call.1} parent=11 // pred_region
          %p146 = scmp.lt.s32.totalorder %s22, 0
          %s147 = scalar_select %p146, %s22, 0
          %s148 = smul.addr %s147, 4
          %s149 = scalar_lea.vmem %s1, %s148
        $region16: #{tpu_custom_call.1} parent=11 // pred_fallthru
          _
        // Predicated region
        $region17: #{tpu_custom_call.1} parent=11 // pred_check
          %p150 = pneg %p102
        $region18: #{tpu_custom_call.1} parent=11 // pred_check_branch
          %152 = sbr.rel (%p150) target = $region20
        $region19: #{tpu_custom_call.1} parent=11 // pred_region
          %s153 = smul.u32 16, %s22
          %p154 = scmp.lt.s32.totalorder %s153, 15
          %s155 = scalar_select %p154, %s153, 15
          %s156 = smul.addr %s155, 4
          %s157 = scalar_lea.vmem %s2, %s156
          %s158 = smul.u32 16, %s22
        $region20: #{tpu_custom_call.1} parent=11 // pred_fallthru
          _
      $region12: #{tpu_custom_call.1} parent=5 // pred_fallthru
        _
      %p159 = scmp.lt.s32.totalorder %s12, 2
      // Predicated region
      $region21: #{tpu_custom_call.1} parent=5 // pred_check
        %p160 = pneg %p159
      $region22: #{tpu_custom_call.1} parent=5 // pred_check_branch
        %162 = sbr.rel (%p160) target = $region24
      $region23: #{tpu_custom_call.1} parent=5 // pred_region
        // Predicated region
        $region25: #{tpu_custom_call.1} parent=23 // pred_check
          %p163 = pneg %p44
        $region26: #{tpu_custom_call.1} parent=23 // pred_check_branch
          %165 = sbr.rel (%p163) target = $region28
        $region27: #{tpu_custom_call.1} parent=23 // pred_region
          %p166 = scmp.lt.s32.totalorder %s19, 1
          %s167 = scalar_select %p166, %s19, 1
          %s168 = smul.addr %s167, 4
          %s169 = scalar_lea.vmem %s0, %s168
        $region28: #{tpu_custom_call.1} parent=23 // pred_fallthru
          _
      $region24: #{tpu_custom_call.1} parent=5 // pred_fallthru
        _
      %p170 = scmp.le.s32.totalorder 1, %s12
      %p171 = scmp.lt.s32.totalorder %s12, 3
      %p172 = pnand %p170, %p171
      %p173 = pneg %p172
      // Predicated region
      $region29: #{tpu_custom_call.1} parent=5 // pred_check
        _
      $region30: #{tpu_custom_call.1} parent=5 // pred_check_branch
        %175 = sbr.rel (%p172) target = $region32
      $region31: #{tpu_custom_call.1} parent=5 // pred_region
        %s176 = ssub.s32 %s12, 1
        %p177 = scmp.lt.s32.totalorder %s21, 1
        %s178 = scalar_select %p177, %s21, 1
        %s179 = smul.addr %s178, 4
        %s180 = scalar_lea.vmem %s0, %s179
        %p181 = pneg %p50
        %p182 = pneg %p47
        %p183 = scmp.lt.s32.totalorder %s22, 0
        %s184 = scalar_select %p183, %s22, 0
        %s185 = smul.addr %s184, 4
        %s186 = scalar_lea.vmem %s1, %s185
        %p187 = pneg %p76
        %p188 = pneg %p73
        %s189 = smul.u32 16, %s22
        %p190 = scmp.lt.s32.totalorder %s189, 15
        %s191 = scalar_select %p190, %s189, 15
        %s192 = smul.addr %s191, 4
        %s193 = scalar_lea.vmem %s2, %s192
        %p194 = pneg %p102
        %p195 = pneg %p99
        %p196 = pneg %p128
        %p197 = pneg %p125
        %s198 = sand.u32 %s115, 1
        %s199 = scalar_lea.sflag [#allocation4], %s198
        %s200 = sand.u32 %s115, 1
        %s201 = smul.addr %s200, 4
        %s202 = scalar_lea.vmem [#allocation3], %s201
        %p203 = scmp.lt.s32.totalorder %s21, 1
        %s204 = scalar_select %p203, %s21, 1
        %s205 = smul.addr %s204, 4
        %s206 = scalar_lea.vmem %s0, %s205
        %p207 = scmp.lt.s32.totalorder %s22, 0
        %s208 = scalar_select %p207, %s22, 0
        %s209 = smul.addr %s208, 4
        %s210 = scalar_lea.vmem %s1, %s209
        %s211 = smul.u32 16, %s22
        %p212 = scmp.lt.s32.totalorder %s211, 15
        %s213 = scalar_select %p212, %s211, 15
        %s214 = smul.addr %s213, 4
        %s215 = scalar_lea.vmem %s2, %s214
        %s216 = smul.u32 16, %s22
        %p218 = scmp.eq.s32.totalorder %s22, 0
        // Predicated region
        $region33: #{tpu_custom_call.1} parent=31 // pred_check
          %p219 = pneg %p218
        $region34: #{tpu_custom_call.1} parent=31 // pred_check_branch
          %221 = sbr.rel (%p219) target = $region36
        $region35: #{tpu_custom_call.1} parent=31 // pred_region
          %vm222 = vcmask 261120
          %223 = vst.msk [vmem:[#allocation2] sm:$0xff] %vm222, 0.0
        $region36: #{tpu_custom_call.1} parent=31 // pred_fallthru
          _
        %v224 = vld [vmem:[%s206] sm:$0xf]
        %v225 = vld [vmem:[%s210] sm:$0xf]
        %v226 = vld [vmem:[%s210 + $0x4] sm:$0xf]
        %v227 = vld [vmem:[%s210 + $0x8] sm:$0xf]
        %v228 = vld [vmem:[%s210 + $0xc] sm:$0xf]
        %v233 = vunpack.c.l.b16 %v225
        %v234 = vunpack.c.l.b16 %v226
        %v235 = vunpack.c.l.b16 %v227
        %v236 = vunpack.c.l.b16 %v228
        %v237 = vpack.c.b16 %v234, %v233
        %v238 = vpack.c.b16 %v236, %v235
        %vm241 = vcmask 261120
        %v243 = vsel %vm241, %v224, 0
        %245 = vmatprep.subr.bf16.mxu0 0
        %246 = vmatpush1.bf16.msra.mxu0 %v237
        %247 = vmatprep.subr.bf16.mxu0 0
        %248 = vmatpush1.bf16.msra.mxu0 %v238
        %249 = vmatprep.subr.bf16.mxu0 0
        %250 = vmatpush1.bf16.msra.mxu0 0
        %251 = vmatprep.subr.bf16.mxu0 0
        %252 = vmatpush1.bf16.msra.mxu0 0
        %253 = vmatprep.subr.bf16.mxu0 0
        %254 = vmatpush1.bf16.msra.mxu0 0
        %255 = vmatprep.subr.bf16.mxu0 0
        %256 = vmatpush1.bf16.msra.mxu0 0
        %257 = vmatprep.subr.bf16.mxu0 0
        %258 = vmatpush1.bf16.msra.mxu0 0
        %259 = vmatprep.subr.bf16.mxu0 0
        %260 = vmatpush1.bf16.msra.mxu0 0
        %261 = vmatprep.subr.bf16.mxu0 0
        %262 = vmatpush1.bf16.msra.mxu0 0
        %263 = vmatprep.subr.bf16.mxu0 0
        %264 = vmatpush1.bf16.msra.mxu0 0
        %265 = vmatprep.subr.bf16.mxu0 0
        %266 = vmatpush1.bf16.msra.mxu0 0
        %267 = vmatprep.subr.bf16.mxu0 0
        %268 = vmatpush1.bf16.msra.mxu0 0
        %269 = vmatprep.subr.bf16.mxu0 0
        %270 = vmatpush1.bf16.msra.mxu0 0
        %271 = vmatprep.subr.bf16.mxu0 0
        %272 = vmatpush1.bf16.msra.mxu0 0
        %273 = vmatprep.subr.bf16.mxu0 0
        %274 = vmatpush1.bf16.msra.mxu0 0
        %275 = vmatprep.subr.bf16.mxu0 0
        %276 = vmatpush1.bf16.msra.mxu0 0
        %277 = vmatprep.mubr.bf16.mxu0 0
        %278 = vmatmul.mubr.bf16.gmra.mrb[0].mxu0 %v243
        %v279 = vpop.f32.mrb[0].mxu0
        %v280 = vadd.f32 0.0, %v279
        %v281 = vpop.f32.mrb[0].mxu0
        %v282 = vpop.f32.mrb[0].mxu0
        %v283 = vpop.f32.mrb[0].mxu0
        %284 = vdwg.mxu0
        %v285 = vmul.f32 %v280, 0.5
        %v286 = vmul.f32 %v280, 0.70710677
        %v287 = verf.f32.pop %v286
        %v288 = vadd.f32 %v287, 1.0
        %v289 = vmul.f32 %v285, %v288
        %v290 = vld [vmem:[#allocation2] sm:$0xff]
        %v291 = vpack.c.bf16 %v289, %v289
        %v292 = vld [vmem:[%s215] sm:$0xf]
        %v293 = vld [vmem:[%s215 + $0x4] sm:$0xf]
        %v294 = vld [vmem:[%s215 + $0x8] sm:$0xf]
        %v295 = vld [vmem:[%s215 + $0xc] sm:$0xf]
        %v296 = vld [vmem:[%s215 + $0x10] sm:$0xf]
        %v297 = vld [vmem:[%s215 + $0x14] sm:$0xf]
        %v298 = vld [vmem:[%s215 + $0x18] sm:$0xf]
        %v299 = vld [vmem:[%s215 + $0x1c] sm:$0xf]
        %v300 = vld [vmem:[%s215 + $0x20] sm:$0xf]
        %v301 = vld [vmem:[%s215 + $0x24] sm:$0xf]
        %v302 = vld [vmem:[%s215 + $0x28] sm:$0xf]
        %v303 = vld [vmem:[%s215 + $0x2c] sm:$0xf]
        %v304 = vld [vmem:[%s215 + $0x30] sm:$0xf]
        %v305 = vld [vmem:[%s215 + $0x34] sm:$0xf]
        %v306 = vld [vmem:[%s215 + $0x38] sm:$0xf]
        %v307 = vld [vmem:[%s215 + $0x3c] sm:$0xf]
        %v324 = vunpack.c.l.b16 %v292
        %v325 = vunpack.c.l.b16 %v293
        %v326 = vunpack.c.l.b16 %v294
        %v327 = vunpack.c.l.b16 %v295
        %v328 = vunpack.c.l.b16 %v296
        %v329 = vunpack.c.l.b16 %v297
        %v330 = vunpack.c.l.b16 %v298
        %v331 = vunpack.c.l.b16 %v299
        %v332 = vunpack.c.l.b16 %v300
        %v333 = vunpack.c.l.b16 %v301
        %v334 = vunpack.c.l.b16 %v302
        %v335 = vunpack.c.l.b16 %v303
        %v336 = vunpack.c.l.b16 %v304
        %v337 = vunpack.c.l.b16 %v305
        %v338 = vunpack.c.l.b16 %v306
        %v339 = vunpack.c.l.b16 %v307
        %v340 = vpack.c.b16 %v325, %v324
        %v341 = vpack.c.b16 %v327, %v326
        %v342 = vpack.c.b16 %v329, %v328
        %v343 = vpack.c.b16 %v331, %v330
        %v344 = vpack.c.b16 %v333, %v332
        %v345 = vpack.c.b16 %v335, %v334
        %v346 = vpack.c.b16 %v337, %v336
        %v347 = vpack.c.b16 %v339, %v338
        %356 = vmatprep.subr.bf16.mxu0 0
        %357 = vmatpush1.bf16.msra.mxu0 %v340
        %358 = vmatprep.subr.bf16.mxu0 0
        %359 = vmatpush1.bf16.msra.mxu0 %v341
        %360 = vmatprep.subr.bf16.mxu0 0
        %361 = vmatpush1.bf16.msra.mxu0 %v342
        %362 = vmatprep.subr.bf16.mxu0 0
        %363 = vmatpush1.bf16.msra.mxu0 %v343
        %364 = vmatprep.subr.bf16.mxu0 0
        %365 = vmatpush1.bf16.msra.mxu0 %v344
        %366 = vmatprep.subr.bf16.mxu0 0
        %367 = vmatpush1.bf16.msra.mxu0 %v345
        %368 = vmatprep.subr.bf16.mxu0 0
        %369 = vmatpush1.bf16.msra.mxu0 %v346
        %370 = vmatprep.subr.bf16.mxu0 0
        %371 = vmatpush1.bf16.msra.mxu0 %v347
        %372 = vmatprep.subr.bf16.mxu0 0
        %373 = vmatpush1.bf16.msra.mxu0 0
        %374 = vmatprep.subr.bf16.mxu0 0
        %375 = vmatpush1.bf16.msra.mxu0 0
        %376 = vmatprep.subr.bf16.mxu0 0
        %377 = vmatpush1.bf16.msra.mxu0 0
        %378 = vmatprep.subr.bf16.mxu0 0
        %379 = vmatpush1.bf16.msra.mxu0 0
        %380 = vmatprep.subr.bf16.mxu0 0
        %381 = vmatpush1.bf16.msra.mxu0 0
        %382 = vmatprep.subr.bf16.mxu0 0
        %383 = vmatpush1.bf16.msra.mxu0 0
        %384 = vmatprep.subr.bf16.mxu0 0
        %385 = vmatpush1.bf16.msra.mxu0 0
        %386 = vmatprep.subr.bf16.mxu0 0
        %387 = vmatpush1.bf16.msra.mxu0 0
        %388 = vmatprep.mubr.bf16.mxu0 0
        %389 = vmatmul.mubr.bf16.gmra.mrb[0].mxu0 %v291
        %v390 = vpop.f32.mrb[0].mxu0
        %v391 = vadd.f32 0.0, %v390
        %v392 = vpop.f32.mrb[0].mxu0
        %v393 = vpop.f32.mrb[0].mxu0
        %v394 = vpop.f32.mrb[0].mxu0
        %395 = vdwg.mxu0
        %v396 = vadd.f32 %v290, %v391
        %397 = vst.msk [vmem:[#allocation2] sm:$0xff] %vm241, %v396
        // Predicated region
        $region37: #{tpu_custom_call.1} parent=31 // pred_check
          %p398 = pneg %p218
        $region38: #{tpu_custom_call.1} parent=31 // pred_check_branch
          %400 = sbr.rel (%p398) target = $region40
        $region39: #{tpu_custom_call.1} parent=31 // pred_region
          %v401 = vld [vmem:[#allocation2] sm:$0xff]
          %v402 = vpack.c.bf16 %v401, %v401
          %vm403 = vcmask 257024
          %404 = vst.msk [vmem:[%s202] sm:$0xf] %vm403, %v402
        $region40: #{tpu_custom_call.1} parent=31 // pred_fallthru
          _
        %s405 = sand.u32 %s115, 1
        %s406 = scalar_lea.sflag [#allocation4], %s405
        %s407 = sand.u32 %s115, 1
        %s408 = smul.addr %s407, 4
        %s409 = scalar_lea.vmem [#allocation3], %s408
        // Predicated region
        $region41: #{tpu_custom_call.1} parent=31 // pred_check
          %p410 = pneg %p125
        $region42: #{tpu_custom_call.1} parent=31 // pred_check_branch
          %412 = sbr.rel (%p410) target = $region44
        $region43: #{tpu_custom_call.1} parent=31 // pred_region
          %s414 = ssub.s32 64, 64
          %415 = vsyncadd %s406, %s414
          %s416 = smul.addr %s21, 64
          %s417 = scalar_lea.hbm %s3, %s416
          %s419 = sshll.u32 %s409, 4
          %s420 = int_to_ptr.vmem [resolvable:$true] %s419
          %422 = dma.vmem_to_hbm [thread:$0]  %s420, 64, %s417, %s406
        $region44: #{tpu_custom_call.1} parent=31 // pred_fallthru
          _
      $region32: #{tpu_custom_call.1} parent=5 // pred_fallthru
        _
      %p423 = scmp.le.s32.totalorder 2, %s12
      // Predicated region
      $region45: #{tpu_custom_call.1} parent=5 // pred_check
        %p424 = pneg %p423
      $region46: #{tpu_custom_call.1} parent=5 // pred_check_branch
        %426 = sbr.rel (%p424) target = $region48
      $region47: #{tpu_custom_call.1} parent=5 // pred_region
        %s427 = ssub.s32 %s12, 2
        // Predicated region
        $region49: #{tpu_custom_call.1} parent=47 // pred_check
          %p428 = pneg %p131
        $region50: #{tpu_custom_call.1} parent=47 // pred_check_branch
          %430 = sbr.rel (%p428) target = $region52
        $region51: #{tpu_custom_call.1} parent=47 // pred_region
          %s431 = sand.u32 %s116, 1
          %s432 = scalar_lea.sflag [#allocation4], %s431
          %s433 = sand.u32 %s116, 1
          %s434 = smul.addr %s433, 4
          %s435 = scalar_lea.vmem [#allocation3], %s434
          %436 = dma.done %s432, 64
        $region52: #{tpu_custom_call.1} parent=47 // pred_fallthru
          _
      $region48: #{tpu_custom_call.1} parent=5 // pred_fallthru
        _
    $region6: #{tpu_custom_call.1} parent=1 // loop_footer
      %s16 = sadd.s32 1, %s12
    $region7: #{tpu_custom_call.1} parent=1 // loop_footer_branch
      %11 = sbr.rel target = $region3
    $region8: #{tpu_custom_call.1} parent=1 // loop_exit
      _
    %437 = vsyncpa [#allocation4], 1
    %s438 = scalar_lea.sflag [#allocation4], 1
    %439 = vsyncpa %s438, 1

</llo_original>
